<compile_context>
chip_gen: v7x
topology: tpu7x:2x2x1
jax: 0.10.0
libtpu: 0.0.40
codegen_flags: <defaults>
</compile_context>

<pallas_src>
import functools

import jax
import jax.numpy as jnp
import numpy as np
from jax import lax
from jax.experimental import pallas as pl
from jax.experimental.pallas import tpu as pltpu


# --------------------------------------------------------------------------
# Kernel
# --------------------------------------------------------------------------
def _cm_kernel(labels_ref, logits_ref, cm_ref, *, C, hw, tile, num_i,
               ignore_val, use_matmul):
    """Accumulate a confusion matrix over one pixel tile of one image chunk.

    labels_ref: (1, 1, TILE) native int dtype (uint8/int16/int32)
    logits_ref: (1, C, TILE) native float dtype (pixels on the lane dim)
    cm_ref:     (1, 1, C*C, 1) f32   (joint path)   -- resident across the i axis
                (1, 1, C,   C) f32   (matmul path)
    """
    s = pl.program_id(1)   # pixel super-chunk (parallel; feeds v7x's 2nd TC)
    i = pl.program_id(2)   # pixel tile within the chunk (reduction axis)

    @pl.when(i == 0)
    def _init():
        cm_ref[...] = jnp.zeros_like(cm_ref)

    logits = logits_ref[0]                                    # (C, TILE) native dtype
    labels = labels_ref[0].astype(jnp.int32)                  # (1, TILE) widened in-kernel

    # ---- argmax over the class (sublane) dim, first-occurrence tie-break ----
    cls_idx = lax.broadcasted_iota(jnp.int32, (C, tile), 0)
    max_val = jnp.max(logits, axis=0, keepdims=True)          # XLU reduce (separate slot)
    pred = jnp.min(jnp.where(logits == max_val, cls_idx, jnp.int32(C)),
                   axis=0, keepdims=True)                     # (1, TILE)
    # TODO(synk): all-NaN logit columns give pred == C and the pixel is dropped,
    # whereas np.argmax would return class 0 (acceptable iff NaNs cannot occur).

    # ---- validity: ragged / clamped pixel tiles + optional ignore class ----
    t = s * num_i + i                                          # logical tile index
    pix = t * tile + lax.broadcasted_iota(jnp.int32, (1, tile), 1)
    valid = pix < hw                                           # masks ragged tail AND
    if ignore_val is not None:                                 # duplicated clamped blocks
        valid = valid & (labels != jnp.int32(ignore_val))

    if not use_matmul:
        # Small-C path: joint one-hot lane reduction (no MXU, no transpose,
        # no bf16 casts).  cm cell index = label*C + pred; pred==C (all-NaN)
        # is excluded so it cannot alias (label+1)*C + 0.
        joint = jnp.where(valid & (pred < C),
                          labels * C + pred, jnp.int32(-1))    # (1, TILE)
        cell = lax.broadcasted_iota(jnp.int32, (C * C, tile), 0)
        hits = (joint == cell).astype(jnp.float32)             # (C*C, TILE)
        partial = jnp.sum(hits, axis=-1, keepdims=True)        # (C*C, 1)
        cm_ref[...] += partial[None, None]
    else:
        # Large-C fallback: bf16 one-hots (exact for 0/1) contracted on the MXU.
        # TODO(synk): this is A @ B.T (contract dim 1 of both), so Mosaic routes
        # one operand through an XLU transpose; building pred_oh in (tile, C)
        # layout would itself need a pixel lane->sublane transpose, so the
        # matmul form is kept as-is for the rarely used large-C case.
        lab = jnp.where(valid, labels, jnp.int32(-1))
        lab_oh = (lab == cls_idx).astype(jnp.bfloat16)          # (C, TILE)
        pred_oh = (pred == cls_idx).astype(jnp.bfloat16)        # (C, TILE)
        partial = lax.dot_general(lab_oh, pred_oh, (((1,), (1,)), ((), ())),
                                  preferred_element_type=jnp.float32)  # (C, C)
        cm_ref[...] += partial[None, None]


# --------------------------------------------------------------------------
# Tiling / VMEM planning
# --------------------------------------------------------------------------
def _vmem_need_bytes(tile, C, logit_isz, label_isz, small_path):
    """Rough VMEM need: double-buffered input windows + in-kernel intermediates."""
    cpad = ((C + 7) // 8) * 8
    c2pad = ((C * C + 7) // 8) * 8
    need = 2 * (C * tile * logit_isz + tile * label_isz) + 2 * C * C * 4
    if small_path:
        # ~3 (C,tile) + ~3 (C*C,tile) + ~8 (1,tile)-rows (each padded to 8 sublanes)
        need += (3 * cpad + 3 * c2pad + 64) * tile * 4
    else:
        # (C,tile) int32 intermediates + bf16 one-hots + (1,tile)-rows
        need += (3 * cpad * 4 + 2 * cpad * 2 + 64 * 4) * tile
    return need


def _plan_tiling(hw, C, logit_isz, label_isz, n, small_path, tile_override=None):
    try:
        capacity = int(pltpu.get_tpu_info().vmem_capacity_bytes)
    except Exception:  # not on TPU / query unavailable: assume the smallest (v7x, 64 MiB)
        capacity = 64 << 20
    budget = capacity // 2

    if tile_override is not None:
        tile = int(tile_override)
        if tile >= hw:
            tile = hw
        else:
            assert tile % 128 == 0, "tile_override must be a multiple of 128"
    else:
        # Bytes-per-step targeted tile (~2 MiB of logits per grid step).
        tile = ((2 << 20) // max(1, C * logit_isz)) // 512 * 512
        tile = max(512, min(tile, 32768))
        if tile >= hw:
            tile = hw            # full-extent lane block: always a legal block shape
        else:
            while tile > 512 and _vmem_need_bytes(tile, C, logit_isz, label_isz,
                                                  small_path) > budget:
                tile = max(512, tile // 2)

    total_tiles = pl.cdiv(hw, tile)
    # Super-chunk axis: give the second TensorCore work when the batch is tiny.
    S = 2 if (n < 2 and total_tiles >= 2) else 1
    num_i = pl.cdiv(total_tiles, S)

    need = _vmem_need_bytes(tile, C, logit_isz, label_isz, small_path)
    vmem_limit = int(min(capacity * 3 // 4, max(need + (4 << 20), 32 << 20)))
    return tile, S, num_i, vmem_limit


# --------------------------------------------------------------------------
# Wrapper
# --------------------------------------------------------------------------
def _reduce_cm_host(partials, num_classes):
    """Exact cross-(image, chunk) reduction in uint64 on host."""
    p = np.asarray(jax.block_until_ready(partials))
    p = p.reshape(-1, num_classes, num_classes)
    return np.rint(p).astype(np.uint64).sum(axis=0)


def confusion_matrix_pallas(labels, logits_nchw, num_classes, ignore_cls=None,
                            tile_override=None):
    """labels: (N, H, W) int; logits_nchw: (N, C, H, W) float -> (C, C) uint64 CM."""
    labels = jnp.asarray(labels)
    logits = jnp.asarray(logits_nchw)
    N, C, H, W = logits.shape
    assert C == num_classes
    HW = H * W

    # Free reshapes only: no transpose, no dtype cast, no full-array padding,
    # no host-side ignore_cls masking.
    logits3 = logits.reshape(N, C, HW)
    labels3 = labels.reshape(N, 1, HW)          # native (possibly uint8) dtype

    logit_isz = logits3.dtype.itemsize
    label_isz = labels3.dtype.itemsize
    small_path = (C * C) <= 256

    tile, S, num_i, vmem_limit = _plan_tiling(HW, C, logit_isz, label_isz, N,
                                              small_path, tile_override)
    total_tiles = pl.cdiv(HW, tile)
    last_block = total_tiles - 1

    kernel = functools.partial(
        _cm_kernel, C=C, hw=HW, tile=tile, num_i=num_i,
        ignore_val=(None if ignore_cls is None else int(ignore_cls)),
        use_matmul=not small_path)

    if small_path:
        out_shape = jax.ShapeDtypeStruct((N, S, C * C, 1), jnp.float32)
        out_specs = pl.BlockSpec((1, 1, C * C, 1), lambda n, s, i: (n, s, 0, 0))
        flops = N * HW * (4 * C + 3 * C * C)
    else:
        out_shape = jax.ShapeDtypeStruct((N, S, C, C), jnp.float32)
        out_specs = pl.BlockSpec((1, 1, C, C), lambda n, s, i: (n, s, 0, 0))
        flops = N * HW * (2 * C * C + 4 * C)

    cost = pl.CostEstimate(
        flops=flops, transcendentals=0,
        bytes_accessed=N * HW * (C * logit_isz + label_isz) + N * S * C * C * 4)

    # Clamp out-of-range pixel blocks (when S*num_i > total_tiles); the in-kernel
    # `pix < hw` mask zeroes any duplicated/ragged data, so clamping is safe.
    def pix_block(s, i):
        return jnp.minimum(s * num_i + i, last_block)

    partials = pl.pallas_call(
        kernel,
        out_shape=out_shape,
        grid_spec=pltpu.PrefetchScalarGridSpec(
            num_scalar_prefetch=0,
            grid=(N, S, num_i),
            in_specs=[
                pl.BlockSpec((1, 1, tile), lambda n, s, i: (n, 0, pix_block(s, i))),
                pl.BlockSpec((1, C, tile), lambda n, s, i: (n, 0, pix_block(s, i))),
            ],
            out_specs=out_specs,
        ),
        compiler_params=pltpu.CompilerParams(
            dimension_semantics=("parallel", "parallel", "arbitrary"),
            vmem_limit_bytes=vmem_limit),
        cost_estimate=cost,
    )(labels3, logits3)

    return _reduce_cm_host(partials, num_classes)


# --------------------------------------------------------------------------
# Stateful metric (host-side uint64 accumulation, matching the torch module)
# --------------------------------------------------------------------------
class IOU:
    """JAX/Pallas port of the PyTorch IOU metric module (stateful accumulator)."""

    def __init__(self, num_classes, exp_name=None, ignore_cls=None,
                 weights=None, clazz_names=None, verbose=False):
        self.num_classes = num_classes
        self.exp_name = exp_name
        self.ignore_cls = ignore_cls
        self.verbose = verbose
        self.cm = np.zeros((num_classes, num_classes), np.uint64)
        self.tps = np.zeros(num_classes, dtype=np.uint64)
        self.fps = np.zeros(num_classes, dtype=np.uint64)
        self.fns = np.zeros(num_classes, dtype=np.uint64)
        self.weights = weights if weights is not None else np.ones(num_classes)
        self.clazz_names = (clazz_names if clazz_names is not None
                            else np.arange(num_classes))

    def update(self, labels, predictions):
        labels = jnp.asarray(labels)
        predictions = jnp.asarray(predictions)
        if predictions.ndim > labels.ndim:
            # predictions are (N, C, H, W) logits -> Pallas confusion-matrix kernel
            cm = confusion_matrix_pallas(labels, predictions, self.num_classes,
                                         ignore_cls=self.ignore_cls)
        else:
            # predictions already are class ids — trivial host path
            labs = np.asarray(labels).reshape(-1)
            preds = np.asarray(predictions).reshape(-1)
            if self.ignore_cls is not None:
                keep = labs != self.ignore_cls
                labs, preds = labs[keep], preds[keep]
            cm = np.zeros((self.num_classes, self.num_classes), np.uint64)
            np.add.at(cm, (labs, preds), 1)

        tps = np.diag(cm)
        fps = cm.sum(0) - tps
        fns = cm.sum(1) - tps
        self.cm += cm
        self.tps += tps
        self.fps += fps
        self.fns += fns
        if self.verbose:
            self.print_stats()
        return cm

    def _compute_stats(self, tps, fps, fns):
        with np.errstate(all='ignore'):
            tps = tps.astype(np.float64)
            fps = fps.astype(np.float64)
            fns = fns.astype(np.float64)
            precisions = tps / (tps + fps)
            recalls = tps / (tps + fns)
            ious = tps / (tps + fps + fns)
        return precisions, recalls, ious

    def print_stats(self):
        precisions, recalls, ious = self._compute_stats(self.tps, self.fps, self.fns)
        for c in range(self.num_classes):
            print(f"class {c}: P={precisions[c]:.3f} R={recalls[c]:.3f} IoU={ious[c]:.3f}")
        print(f"mIoU {np.nanmean(ious)}")

    def reset(self):
        self.cm = np.zeros((self.num_classes, self.num_classes), np.uint64)
        self.tps = np.zeros(self.num_classes, dtype=np.uint64)
        self.fps = np.zeros(self.num_classes, dtype=np.uint64)
        self.fns = np.zeros(self.num_classes, dtype=np.uint64)


# --------------------------------------------------------------------------
# Reference + tests
# --------------------------------------------------------------------------
def _numpy_reference_cm(labels, logits, num_classes, ignore_cls=None):
    preds = np.argmax(np.asarray(logits, dtype=np.float32), 1).reshape(-1)
    labs = np.asarray(labels).reshape(-1)
    if ignore_cls is not None:
        keep = labs != ignore_cls
        labs, preds = labs[keep], preds[keep]
    cm = np.zeros((num_classes, num_classes), np.uint64)
    np.add.at(cm, (labs.astype(np.int64), preds.astype(np.int64)), 1)
    return cm


if __name__ == "__main__":
    num_classes = 4
    key = jax.random.PRNGKey(0)
    k1, k2, k3, k4 = jax.random.split(key, 4)

    # Case 1: nominal module shapes through the stateful metric class.
    N, C, H, W = 2, num_classes, 16, 16
    predictions = jax.random.normal(k1, (N, C, H, W), dtype=jnp.float32)
    labels = jax.random.randint(k2, (N, H, W), 0, num_classes, dtype=jnp.int32)

    metric = IOU(num_classes=num_classes)
    cm = metric.update(labels=labels, predictions=predictions)

    ref_cm = _numpy_reference_cm(np.asarray(labels), np.asarray(predictions),
                                 num_classes)
    assert np.array_equal(cm, ref_cm), (cm, ref_cm)
    assert np.array_equal(metric.tps, np.diag(ref_cm))
    assert np.array_equal(metric.fps, ref_cm.sum(0) - np.diag(ref_cm))
    assert np.array_equal(metric.fns, ref_cm.sum(1) - np.diag(ref_cm))

    # Case 2: ragged pixel tiles, super-chunk axis (N=1 -> S=2), clamped last
    # block, uint8 labels widened in-kernel, ignore_cls compared in-kernel.
    N2, H2, W2 = 1, 17, 17   # HW = 289, tile_override=128 -> 3 tiles over 2 chunks
    preds2 = jax.random.normal(k3, (N2, C, H2, W2), dtype=jnp.float32)
    labels2 = jax.random.randint(k4, (N2, H2, W2), 0, num_classes,
                                 dtype=jnp.int32).astype(jnp.uint8)
    cm2 = confusion_matrix_pallas(labels2, preds2, num_classes,
                                  ignore_cls=1, tile_override=128)
    ref2 = _numpy_reference_cm(np.asarray(labels2), np.asarray(preds2),
                               num_classes, ignore_cls=1)
    assert np.array_equal(cm2, ref2), (cm2, ref2)

    print("KERNEL_OK")
</pallas_src>

<mosaic_0001>
module attributes {stable_mosaic.version = 11 : i64} {
  func.func @_cm_kernel(%arg0: i32, %arg1: i32, %arg2: i32, %arg3: memref<1x1x256xi32, #tpu.memory_space<vmem>>, %arg4: memref<1x4x256xf32, #tpu.memory_space<vmem>>, %arg5: memref<1x1x16x1xf32, #tpu.memory_space<vmem>>) attributes {dimension_semantics = [#tpu.dimension_semantics<parallel>, #tpu.dimension_semantics<parallel>, #tpu.dimension_semantics<arbitrary>], iteration_bounds = array<i64: 2, 1, 1>, scalar_prefetch = 0 : i64, scratch_operands = 0 : i64, tpu.core_type = #tpu.core_type<tc>, window_params = [{transform_indices = @transform_0, window_bounds = array<i64: 1, 1, 256>}, {transform_indices = @transform_1, window_bounds = array<i64: 1, 4, 256>}, {transform_indices = @transform_2, window_bounds = array<i64: 1, 1, 16, 1>}]} {
    %c0_i32 = arith.constant 0 : i32
    %0 = arith.cmpi eq, %arg2, %c0_i32 : i32
    %1 = arith.extui %0 : i1 to i32
    %c0_i32_0 = arith.constant 0 : i32
    %2 = arith.cmpi ne, %1, %c0_i32_0 : i32
    scf.if %2 {
      %cst_19 = arith.constant 0.000000e+00 : f32
      %43 = vector.broadcast %cst_19 : f32 to vector<1x1x16x1xf32>
      %c0_20 = arith.constant 0 : index
      %c0_21 = arith.constant 0 : index
      %c0_22 = arith.constant 0 : index
      %c0_23 = arith.constant 0 : index
      %44 = vector.load %arg5[%c0_20, %c0_21, %c0_22, %c0_23] : memref<1x1x16x1xf32, #tpu.memory_space<vmem>>, vector<1x1x16x1xf32>
      tpu.vector_store %arg5[%c0_20, %c0_21, %c0_22, %c0_23], %43 {strides = array<i32>} : memref<1x1x16x1xf32, #tpu.memory_space<vmem>>, vector<1x1x16x1xf32>,
    } else {
    }
    %c0 = arith.constant 0 : index
    %c0_1 = arith.constant 0 : index
    %c0_2 = arith.constant 0 : index
    %3 = vector.load %arg4[%c0, %c0_1, %c0_2] : memref<1x4x256xf32, #tpu.memory_space<vmem>>, vector<1x4x256xf32>
    %4 = vector.shape_cast %3 : vector<1x4x256xf32> to vector<4x256xf32>
    %c0_3 = arith.constant 0 : index
    %c0_4 = arith.constant 0 : index
    %c0_5 = arith.constant 0 : index
    %5 = vector.load %arg3[%c0_3, %c0_4, %c0_5] : memref<1x1x256xi32, #tpu.memory_space<vmem>>, vector<1x1x256xi32>
    %6 = vector.shape_cast %5 : vector<1x1x256xi32> to vector<1x256xi32>
    %7 = tpu.iota {dimensions = array<i32: 0>} : vector<4x256xi32>
    %cst = arith.constant dense<0xFF800000> : vector<256xf32>
    %8 = vector.multi_reduction <maximumf>, %4, %cst [0] : vector<4x256xf32> to vector<256xf32>
    %9 = vector.shape_cast %8 : vector<256xf32> to vector<1x256xf32>
    %10 = vector.broadcast %9 : vector<1x256xf32> to vector<4x256xf32>
    %11 = arith.cmpf oeq, %4, %10 : vector<4x256xf32>
    %c4_i32 = arith.constant 4 : i32
    %12 = vector.broadcast %c4_i32 : i32 to vector<4x256xi32>
    %13 = arith.select %11, %7, %12 : vector<4x256xi1>, vector<4x256xi32>
    %cst_6 = arith.constant dense<2147483647> : vector<256xi32>
    %14 = vector.multi_reduction <minsi>, %13, %cst_6 [0] : vector<4x256xi32> to vector<256xi32>
    %15 = vector.shape_cast %14 : vector<256xi32> to vector<1x256xi32>
    %c1_i32 = arith.constant 1 : i32
    %16 = arith.muli %arg1, %c1_i32 : i32
    %17 = arith.addi %16, %arg2 : i32
    %c256_i32 = arith.constant 256 : i32
    %18 = arith.muli %17, %c256_i32 : i32
    %19 = tpu.iota {dimensions = array<i32: 1>} : vector<1x256xi32>
    %20 = vector.broadcast %18 : i32 to vector<1x256xi32>
    %21 = arith.addi %20, %19 : vector<1x256xi32>
    %c256_i32_7 = arith.constant 256 : i32
    %22 = vector.broadcast %c256_i32_7 : i32 to vector<1x256xi32>
    %23 = arith.cmpi slt, %21, %22 : vector<1x256xi32>
    %c4_i32_8 = arith.constant 4 : i32
    %24 = vector.broadcast %c4_i32_8 : i32 to vector<1x256xi32>
    %25 = arith.cmpi slt, %15, %24 : vector<1x256xi32>
    %26 = arith.andi %23, %25 : vector<1x256xi1>
    %c4_i32_9 = arith.constant 4 : i32
    %27 = vector.broadcast %c4_i32_9 : i32 to vector<1x256xi32>
    %28 = arith.muli %6, %27 : vector<1x256xi32>
    %29 = arith.addi %28, %15 : vector<1x256xi32>
    %c-1_i32 = arith.constant -1 : i32
    %30 = vector.broadcast %c-1_i32 : i32 to vector<1x256xi32>
    %31 = arith.select %26, %29, %30 : vector<1x256xi1>, vector<1x256xi32>
    %32 = tpu.iota {dimensions = array<i32: 0>} : vector<16x256xi32>
    %33 = vector.broadcast %31 : vector<1x256xi32> to vector<16x256xi32>
    %34 = arith.cmpi eq, %33, %32 : vector<16x256xi32>
    %35 = arith.extui %34 : vector<16x256xi1> to vector<16x256xi32>
    %36 = arith.sitofp %35 : vector<16x256xi32> to vector<16x256xf32>
    %cst_10 = arith.constant dense<0.000000e+00> : vector<16xf32>
    %37 = vector.multi_reduction <add>, %36, %cst_10 [1] : vector<16x256xf32> to vector<16xf32>
    %38 = vector.shape_cast %37 : vector<16xf32> to vector<16x1xf32>
    %c0_11 = arith.constant 0 : index
    %c0_12 = arith.constant 0 : index
    %c0_13 = arith.constant 0 : index
    %c0_14 = arith.constant 0 : index
    %39 = vector.load %arg5[%c0_11, %c0_12, %c0_13, %c0_14] : memref<1x1x16x1xf32, #tpu.memory_space<vmem>>, vector<1x1x16x1xf32>
    %40 = vector.shape_cast %38 : vector<16x1xf32> to vector<1x1x16x1xf32>
    %41 = arith.addf %39, %40 : vector<1x1x16x1xf32>
    %c0_15 = arith.constant 0 : index
    %c0_16 = arith.constant 0 : index
    %c0_17 = arith.constant 0 : index
    %c0_18 = arith.constant 0 : index
    %42 = vector.load %arg5[%c0_15, %c0_16, %c0_17, %c0_18] : memref<1x1x16x1xf32, #tpu.memory_space<vmem>>, vector<1x1x16x1xf32>
    tpu.vector_store %arg5[%c0_15, %c0_16, %c0_17, %c0_18], %41 {strides = array<i32>} : memref<1x1x16x1xf32, #tpu.memory_space<vmem>>, vector<1x1x16x1xf32>,
    return
  }
  func.func @transform_0(%arg0: i32, %arg1: i32, %arg2: i32) -> (i32, i32, i32) {
    %c1_i32 = arith.constant 1 : i32
    %0 = arith.muli %arg1, %c1_i32 : i32
    %1 = arith.addi %0, %arg2 : i32
    %c0_i32 = arith.constant 0 : i32
    %2 = arith.minsi %1, %c0_i32 : i32
    %c0_i32_0 = arith.constant 0 : i32
    %c0_i32_1 = arith.constant 0 : i32
    return %arg0, %c0_i32_0, %2 : i32, i32, i32
  }
  func.func @transform_1(%arg0: i32, %arg1: i32, %arg2: i32) -> (i32, i32, i32) {
    %c1_i32 = arith.constant 1 : i32
    %0 = arith.muli %arg1, %c1_i32 : i32
    %1 = arith.addi %0, %arg2 : i32
    %c0_i32 = arith.constant 0 : i32
    %2 = arith.minsi %1, %c0_i32 : i32
    %c0_i32_0 = arith.constant 0 : i32
    %c0_i32_1 = arith.constant 0 : i32
    return %arg0, %c0_i32_0, %2 : i32, i32, i32
  }
  func.func @transform_2(%arg0: i32, %arg1: i32, %arg2: i32) -> (i32, i32, i32, i32) {
    %c0_i32 = arith.constant 0 : i32
    %c0_i32_0 = arith.constant 0 : i32
    %c0_i32_1 = arith.constant 0 : i32
    return %arg0, %arg1, %c0_i32, %c0_i32_0 : i32, i32, i32, i32
  }
}

</mosaic_0001>

<llo_original>
// kernel: tpu_custom_call.1
$region0: #{tpu_custom_call.1}
  #allocation0 [shape = 'u32[]', space=smem, size = 0x4, offset = 0x4, fixed_abs, tag = 'smem constant byte address 0x4 - core index']
  #allocation1 [shape = 'u32[144,128]{1,0:T(1,128)}', space=vmem, size = 0x12000, scoped, tag = 'internal scratch']
  %s0 = inlined_call_operand.hbm [shape: s32[2,1,256], index: 0, kind: input, shape index: {}]
  %s1 = inlined_call_operand.hbm [shape: f32[2,4,256], index: 1, kind: input, shape index: {}]
  %s2 = inlined_call_operand.vmem [shape: f32[2,1,16,1], index: 2, kind: output, shape index: {}]
  %s3 = sld [smem:[#allocation0]]
  $region53: #{tpu_custom_call.1} parent=0
    _
  %s5 = ssub.s32 1, %s3
  %s6 = scalar_select 0, %s5, %s3
  $region1: #{tpu_custom_call.1} parent=0
    #allocation2 [shape = 'u8[2048]{0}', space=vmem, size = 0x800, scoped, tag = 'input window, operand 0']
    #allocation3 [shape = 's32[2]{0}', space=sflag, size = 0x8, scoped, tag = 'scoped memory for tpu_custom_call.1']
    #allocation4 [shape = 'u8[8192]{0}', space=vmem, size = 0x2000, scoped, tag = 'input window, operand 1']
    #allocation5 [shape = 's32[2]{0}', space=sflag, size = 0x8, scoped, tag = 'scoped memory for tpu_custom_call.1']
    %7 = vsyncpa [#allocation3], 0
    %s8 = scalar_lea.sflag [#allocation3], 1
    %9 = vsyncpa %s8, 0
    %10 = vsyncpa [#allocation5], 0
    %s11 = scalar_lea.sflag [#allocation5], 1
    %12 = vsyncpa %s11, 0
    loop: start=0, step=1, limit=4
    $region2: #{tpu_custom_call.1} parent=1 // loop_pre_header
      _
    $region3: #{tpu_custom_call.1} parent=1 // loop_header
      %s14 = sphi 0, %s18
      %p15 = scmp.ge.s32.totalorder %s14, 4
      %s21 = sphi 0, %s40
      %s22 = sphi 0, %s36
      %s23 = sphi 0, %s32
      %s24 = sphi 0, %s21
      %s25 = sphi 0, %s22
      %s26 = sphi 0, %s23
      %s27 = sphi 0, %s24
      %s28 = sphi 0, %s25
      %s29 = sphi 0, %s26
      %s51 = sphi 0, %s53
      %s54 = sphi 0, %s51
      %s55 = sphi 0, %s54
      %s71 = sphi 0, %s55
      %s85 = sphi 0, %s87
      %s88 = sphi 0, %s85
      %s89 = sphi 0, %s88
      %s105 = sphi 0, %s89
      %s113 = sphi 0, %s115
      %s116 = sphi 0, %s113
      %s117 = sphi 0, %s116
      %s133 = sphi 0, %s117
    $region4: #{tpu_custom_call.1} parent=1 // loop_header_branch
      %17 = sbr.rel (%p15) target = $region8
    $region5: #{tpu_custom_call.1} parent=1 // loop_body
      %s19 = ssub.s32 %s14, 1
      %s20 = ssub.s32 %s14, 2
      %s30 = sadd.s32 1, %s23
      %p31 = scmp.ge.s32.totalorder %s30, 1
      %s32 = scalar_select %p31, 0, %s30
      %s33 = sadd.s32 1, %s22
      %s34 = scalar_select %p31, %s33, %s22
      %p35 = scmp.ge.s32.totalorder %s34, 1
      %s36 = scalar_select %p35, 0, %s34
      %s37 = sadd.s32 1, %s21
      %s38 = scalar_select %p35, %s37, %s21
      %p39 = scmp.ge.s32.totalorder %s38, 2
      %s40 = scalar_select %p39, 0, %s38
      %s41 = sadd.s32 %s22, %s23
      %p42 = scmp.lt.s32.totalorder %s41, 0
      %s43 = scalar_select %p42, %s41, 0
      %s44 = sadd.s32 %s36, %s32
      %p45 = scmp.lt.s32.totalorder %s44, 0
      %s46 = scalar_select %p45, %s44, 0
      %s47 = ssub.s32 %s21, %s40
      %s48 = ssub.s32 %s43, %s46
      %s49 = sor.u32 %s47, %s48
      %p50 = scmp.eq.s32.totalorder %s49, 0
      %s52 = sadd.s32 %s51, 1
      %s53 = scalar_select %p50, %s51, %s52
      %p56 = pneg %p50
      %p57 = scmp.eq.s32.totalorder %s14, 1
      %p58 = por %p56, %p57
      %p59 = scmp.ne.s32.totalorder %s51, %s54
      %p60 = scmp.eq.s32.totalorder %s14, 0
      %p61 = por %p59, %p60
      %p62 = scmp.ne.s32.totalorder %s51, %s54
      %p63 = scmp.eq.s32.totalorder %s19, 1
      %p64 = por %p62, %p63
      %p65 = scmp.ne.s32.totalorder %s54, %s55
      %p66 = scmp.eq.s32.totalorder %s19, 0
      %p67 = por %p65, %p66
      %p68 = scmp.ne.s32.totalorder %s54, %s55
      %p69 = scmp.eq.s32.totalorder %s20, 1
      %p70 = por %p68, %p69
      %p72 = scmp.ne.s32.totalorder %s55, %s71
      %p73 = scmp.eq.s32.totalorder %s20, 0
      %p74 = por %p72, %p73
      %s75 = sadd.s32 %s22, %s23
      %p76 = scmp.lt.s32.totalorder %s75, 0
      %s77 = scalar_select %p76, %s75, 0
      %s78 = sadd.s32 %s36, %s32
      %p79 = scmp.lt.s32.totalorder %s78, 0
      %s80 = scalar_select %p79, %s78, 0
      %s81 = ssub.s32 %s21, %s40
      %s82 = ssub.s32 %s77, %s80
      %s83 = sor.u32 %s81, %s82
      %p84 = scmp.eq.s32.totalorder %s83, 0
      %s86 = sadd.s32 %s85, 1
      %s87 = scalar_select %p84, %s85, %s86
      %p90 = pneg %p84
      %p91 = scmp.eq.s32.totalorder %s14, 1
      %p92 = por %p90, %p91
      %p93 = scmp.ne.s32.totalorder %s85, %s88
      %p94 = scmp.eq.s32.totalorder %s14, 0
      %p95 = por %p93, %p94
      %p96 = scmp.ne.s32.totalorder %s85, %s88
      %p97 = scmp.eq.s32.totalorder %s19, 1
      %p98 = por %p96, %p97
      %p99 = scmp.ne.s32.totalorder %s88, %s89
      %p100 = scmp.eq.s32.totalorder %s19, 0
      %p101 = por %p99, %p100
      %p102 = scmp.ne.s32.totalorder %s88, %s89
      %p103 = scmp.eq.s32.totalorder %s20, 1
      %p104 = por %p102, %p103
      %p106 = scmp.ne.s32.totalorder %s89, %s105
      %p107 = scmp.eq.s32.totalorder %s20, 0
      %p108 = por %p106, %p107
      %s109 = ssub.s32 %s21, %s40
      %s110 = ssub.s32 %s22, %s36
      %s111 = sor.u32 %s109, %s110
      %p112 = scmp.eq.s32.totalorder %s111, 0
      %s114 = sadd.s32 %s113, 1
      %s115 = scalar_select %p112, %s113, %s114
      %p118 = pneg %p112
      %p119 = scmp.eq.s32.totalorder %s14, 1
      %p120 = por %p118, %p119
      %p121 = scmp.ne.s32.totalorder %s113, %s116
      %p122 = scmp.eq.s32.totalorder %s14, 0
      %p123 = por %p121, %p122
      %p124 = scmp.ne.s32.totalorder %s113, %s116
      %p125 = scmp.eq.s32.totalorder %s19, 1
      %p126 = por %p124, %p125
      %p127 = scmp.ne.s32.totalorder %s116, %s117
      %p128 = scmp.eq.s32.totalorder %s19, 0
      %p129 = por %p127, %p128
      %p130 = scmp.ne.s32.totalorder %s116, %s117
      %p131 = scmp.eq.s32.totalorder %s20, 1
      %p132 = por %p130, %p131
      %p134 = scmp.ne.s32.totalorder %s117, %s133
      %p135 = scmp.eq.s32.totalorder %s20, 0
      %p136 = por %p134, %p135
      %p137 = scmp.le.s32.totalorder 1, %s14
      %p138 = scmp.lt.s32.totalorder %s14, 3
      %p139 = pnand %p137, %p138
      %p140 = pneg %p139
      // Predicated region
      $region9: #{tpu_custom_call.1} parent=5 // pred_check
        _
      $region10: #{tpu_custom_call.1} parent=5 // pred_check_branch
        %142 = sbr.rel (%p139) target = $region12
      $region11: #{tpu_custom_call.1} parent=5 // pred_region
        %s143 = ssub.s32 %s14, 1
      $region12: #{tpu_custom_call.1} parent=5 // pred_fallthru
        _
      %p144 = scmp.lt.s32.totalorder %s14, 2
      // Predicated region
      $region13: #{tpu_custom_call.1} parent=5 // pred_check
        %p145 = pneg %p144
      $region14: #{tpu_custom_call.1} parent=5 // pred_check_branch
        %147 = sbr.rel (%p145) target = $region16
      $region15: #{tpu_custom_call.1} parent=5 // pred_region
        // Predicated region
        $region17: #{tpu_custom_call.1} parent=15 // pred_check
          %p148 = pneg %p61
        $region18: #{tpu_custom_call.1} parent=15 // pred_check_branch
          %150 = sbr.rel (%p148) target = $region20
        $region19: #{tpu_custom_call.1} parent=15 // pred_region
          %s151 = sand.u32 %s51, 1
          %s152 = scalar_lea.sflag [#allocation3], %s151
          %s153 = sand.u32 %s51, 1
          %s154 = smul.addr %s153, 2
          %s155 = scalar_lea.vmem [#allocation2], %s154
          %s156 = sadd.s32 %s22, %s23
          %p157 = scmp.lt.s32.totalorder %s156, 0
          %s158 = scalar_select %p157, %s156, 0
          %s159 = smul.u32 2, %s158
          %s161 = ssub.s32 32, 32
          %162 = vsyncadd %s152, %s161
          %s163 = smul.addr %s21, 2
          %s164 = sadd.s32 %s159, %s163
          %s165 = smul.addr %s164, 16
          %s166 = scalar_lea.hbm %s0, %s165
          %s168 = sshll.u32 %s155, 4
          %s169 = int_to_ptr.vmem [resolvable:$true] %s168
          %171 = dma.hbm_to_vmem [thread:$0]  %s166, 32, %s169, %s152
        $region20: #{tpu_custom_call.1} parent=15 // pred_fallthru
          _
        // Predicated region
        $region21: #{tpu_custom_call.1} parent=15 // pred_check
          %p172 = pneg %p95
        $region22: #{tpu_custom_call.1} parent=15 // pred_check_branch
          %174 = sbr.rel (%p172) target = $region24
        $region23: #{tpu_custom_call.1} parent=15 // pred_region
          %s175 = sand.u32 %s85, 1
          %s176 = scalar_lea.sflag [#allocation5], %s175
          %s177 = sand.u32 %s85, 1
          %s178 = smul.addr %s177, 8
          %s179 = scalar_lea.vmem [#allocation4], %s178
          %s180 = sadd.s32 %s22, %s23
          %p181 = scmp.lt.s32.totalorder %s180, 0
          %s182 = scalar_select %p181, %s180, 0
          %s183 = smul.u32 2, %s182
          %s185 = ssub.s32 128, 128
          %186 = vsyncadd %s176, %s185
          %s187 = smul.addr %s21, 2
          %s188 = sadd.s32 %s183, %s187
          %s189 = smul.addr %s188, 64
          %s190 = scalar_lea.hbm %s1, %s189
          %s192 = sshll.u32 %s179, 4
          %s193 = int_to_ptr.vmem [resolvable:$true] %s192
          %195 = dma.hbm_to_vmem [thread:$0]  %s190, 128, %s193, %s176
        $region24: #{tpu_custom_call.1} parent=15 // pred_fallthru
          _
      $region16: #{tpu_custom_call.1} parent=5 // pred_fallthru
        _
      %p196 = scmp.le.s32.totalorder 1, %s14
      %p197 = scmp.lt.s32.totalorder %s14, 3
      %p198 = pnand %p196, %p197
      %p199 = pneg %p198
      // Predicated region
      $region25: #{tpu_custom_call.1} parent=5 // pred_check
        _
      $region26: #{tpu_custom_call.1} parent=5 // pred_check_branch
        %201 = sbr.rel (%p198) target = $region28
      $region27: #{tpu_custom_call.1} parent=5 // pred_region
        %s202 = ssub.s32 %s14, 1
        %s203 = sand.u32 %s54, 1
        %s204 = scalar_lea.sflag [#allocation3], %s203
        %s205 = sand.u32 %s54, 1
        %s206 = smul.addr %s205, 2
        %s207 = scalar_lea.vmem [#allocation2], %s206
        // Predicated region
        $region29: #{tpu_custom_call.1} parent=27 // pred_check
          %p208 = pneg %p67
        $region30: #{tpu_custom_call.1} parent=27 // pred_check_branch
          %210 = sbr.rel (%p208) target = $region32
        $region31: #{tpu_custom_call.1} parent=27 // pred_region
          %211 = dma.done %s204, 32
        $region32: #{tpu_custom_call.1} parent=27 // pred_fallthru
          _
        %s212 = sand.u32 %s88, 1
        %s213 = scalar_lea.sflag [#allocation5], %s212
        %s214 = sand.u32 %s88, 1
        %s215 = smul.addr %s214, 8
        %s216 = scalar_lea.vmem [#allocation4], %s215
        // Predicated region
        $region33: #{tpu_custom_call.1} parent=27 // pred_check
          %p217 = pneg %p101
        $region34: #{tpu_custom_call.1} parent=27 // pred_check_branch
          %219 = sbr.rel (%p217) target = $region36
        $region35: #{tpu_custom_call.1} parent=27 // pred_region
          %220 = dma.done %s213, 128
        $region36: #{tpu_custom_call.1} parent=27 // pred_fallthru
          _
        %s221 = sand.u32 %s54, 1
        %s222 = scalar_lea.sflag [#allocation3], %s221
        %s223 = sand.u32 %s54, 1
        %s224 = smul.addr %s223, 2
        %s225 = scalar_lea.vmem [#allocation2], %s224
        %p226 = pneg %p67
        %p227 = pneg %p64
        %s228 = sand.u32 %s88, 1
        %s229 = scalar_lea.sflag [#allocation5], %s228
        %s230 = sand.u32 %s88, 1
        %s231 = smul.addr %s230, 8
        %s232 = scalar_lea.vmem [#allocation4], %s231
        %p233 = pneg %p101
        %p234 = pneg %p98
        %p235 = pneg %p129
        %p236 = pneg %p126
        %p237 = scmp.lt.s32.totalorder %s24, 1
        %s238 = scalar_select %p237, %s24, 1
        %p239 = scmp.lt.s32.totalorder %s25, 0
        %s240 = scalar_select %p239, %s25, 0
        %s241 = smul.addr %s240, 2
        %s242 = smul.addr %s238, 2
        %s243 = sadd.s32 %s241, %s242
        %s244 = smul.addr %s243, 8
        %s245 = scalar_lea.vmem %s2, %s244
        %s246 = sadd.s32 %s25, %s26
        %p247 = scmp.lt.s32.totalorder %s246, 0
        %s248 = scalar_select %p247, %s246, 0
        %s249 = smul.u32 2, %s248
        %s250 = sadd.s32 %s25, %s26
        %p251 = scmp.lt.s32.totalorder %s250, 0
        %s252 = scalar_select %p251, %s250, 0
        %s253 = smul.u32 2, %s252
        %p254 = scmp.lt.s32.totalorder %s24, 1
        %s255 = scalar_select %p254, %s24, 1
        %p256 = scmp.lt.s32.totalorder %s25, 0
        %s257 = scalar_select %p256, %s25, 0
        %s258 = smul.addr %s257, 2
        %s259 = smul.addr %s255, 2
        %s260 = sadd.s32 %s258, %s259
        %s261 = smul.addr %s260, 8
        %s262 = scalar_lea.vmem %s2, %s261
        %p263 = scmp.eq.s32.totalorder %s26, 0
        // Predicated region
        $region37: #{tpu_custom_call.1} parent=27 // pred_check
          %p264 = pneg %p263
        $region38: #{tpu_custom_call.1} parent=27 // pred_check_branch
          %266 = sbr.rel (%p264) target = $region40
        $region39: #{tpu_custom_call.1} parent=27 // pred_region
          %vm267 = vcmask 7168
          %268 = vst.msk [vmem:[%s262] sm:$0xff] %vm267, 0.0
          %269 = vst.msk [vmem:[%s262 + $0x8] sm:$0xff] %vm267, 0.0
        $region40: #{tpu_custom_call.1} parent=27 // pred_fallthru
          _
        %v270 = vld [vmem:[%s216] sm:$0xff]
        %v271 = vld [vmem:[%s207] sm:$0x3]
        %v272 = vlaneseq
        %v273 = vshrl.u32 %v272, 7
        %v275 = vcombine.high %v270, %v270
        %vm277 = vcmask 1043456
        %v278 = vsel %vm277, %v270, -inf
        %v279 = vrot.slane %v278, 4
        %v280 = vmax.f32 %v278, %v279
        %v281 = vrot.slane %v280, 2
        %v282 = vmax.f32 %v280, %v281
        %v283 = vrot.slane %v282, 1
        %v284 = vmax.f32 %v282, %v283
        %v285 = vsel %vm277, %v275, -inf
        %v286 = vrot.slane %v285, 4
        %v287 = vmax.f32 %v285, %v286
        %v288 = vrot.slane %v287, 2
        %v289 = vmax.f32 %v287, %v288
        %v290 = vrot.slane %v289, 1
        %v291 = vmax.f32 %v289, %v290
        %v294 = vcombine.low %v284, %v291
        %vm296 = vcmp.eq.f32.partialorder %v270, %v294
        %v298 = vunpack.c.l.s4 839922192
        %v299 = vunpack.c.0.s8 %v298
        %v300 = vlaneseq
        %v301 = vshrl.u32 %v300, 7
        %v302 = vsub.s32 %v299, %v301
        %v303 = vrot.slane %v273, %v302
        %v304 = vsel %vm296, %v303, 4
        %v305 = vcombine.high %v304, %v304
        %v306 = vsel %vm277, %v304, 2147483647
        %v307 = vrot.slane %v306, 4
        %vm308 = vcmp.lt.s32.totalorder %v306, %v307
        %v309 = vsel %vm308, %v306, %v307
        %v310 = vrot.slane %v309, 2
        %vm311 = vcmp.lt.s32.totalorder %v309, %v310
        %v312 = vsel %vm311, %v309, %v310
        %v313 = vrot.slane %v312, 1
        %vm314 = vcmp.lt.s32.totalorder %v312, %v313
        %v315 = vsel %vm314, %v312, %v313
        %v316 = vsel %vm277, %v305, 2147483647
        %v317 = vrot.slane %v316, 4
        %vm318 = vcmp.lt.s32.totalorder %v316, %v317
        %v319 = vsel %vm318, %v316, %v317
        %v320 = vrot.slane %v319, 2
        %vm321 = vcmp.lt.s32.totalorder %v319, %v320
        %v322 = vsel %vm321, %v319, %v320
        %v323 = vrot.slane %v322, 1
        %vm324 = vcmp.lt.s32.totalorder %v322, %v323
        %v325 = vsel %vm324, %v322, %v323
        %s326 = sadd.s32 %s25, %s26
        %s327 = smul.u32 %s326, 256
        %v328 = vlaneseq
        %v329 = vand.u32 %v328, 127
        %v330 = vadd.s32 %v329, 128
        %v331 = vstv %s327
        %v332 = vadd.s32 %v331, %v329
        %v333 = vadd.s32 %v331, %v330
        %vm334 = vcmp.lt.s32.totalorder %v332, 256
        %vm335 = vcmp.lt.s32.totalorder %v333, 256
        %vm336 = vcmp.lt.s32.totalorder %v315, 4
        %vm337 = vcmp.lt.s32.totalorder %v325, 4
        %vm338 = vmand %vm334, %vm336
        %vm339 = vmand %vm335, %vm337
        %v340 = vmul.u32 %v271, 4
        %v341 = vcombine.low %v315, %v325
        %v343 = vunpack.c.l.s4 1966171168
        %v344 = vunpack.c.0.s8 %v343
        %v345 = vlaneseq
        %v346 = vshrl.u32 %v345, 7
        %v347 = vsub.s32 %v344, %v346
        %v348 = vrot.slane %v341, %v347
        %v350 = vunpack.c.l.s4 1966171168
        %v351 = vunpack.c.0.s8 %v350
        %v352 = vlaneseq
        %v353 = vshrl.u32 %v352, 7
        %v354 = vsub.s32 %v351, %v353
        %v355 = vrot.slane %v348, %v354
        %v356 = vadd.s32 %v340, %v355
        %v357 = vlaneseq
        %v358 = vshrl.u32 %v357, 7
        %v359 = vsub.s32 0, %v358
        %v360 = vrot.slane %v356, %v359
        %v361 = vlaneseq
        %v362 = vshrl.u32 %v361, 7
        %v363 = vsub.s32 1, %v362
        %v364 = vrot.slane %v356, %v363
        %v365 = vsel %vm338, %v360, 4294967295
        %v366 = vsel %vm339, %v364, 4294967295
        %v367 = vadd.s32 %v273, 8
        %v368 = vlaneseq
        %v369 = vshrl.u32 %v368, 7
        %v370 = vsub.s32 0, %v369
        %v371 = vrot.slane %v365, %v370
        %v372 = vlaneseq
        %v373 = vshrl.u32 %v372, 7
        %v374 = vsub.s32 0, %v373
        %v375 = vrot.slane %v366, %v374
        %vm376 = vcmp.eq.s32.totalorder %v371, %v273
        %vm377 = vcmp.eq.s32.totalorder %v375, %v273
        %vm378 = vcmp.eq.s32.totalorder %v371, %v367
        %vm379 = vcmp.eq.s32.totalorder %v375, %v367
        %v380 = vsel %vm376, 1, 0
        %v381 = vsel %vm377, 1, 0
        %v382 = vsel %vm378, 1, 0
        %v383 = vsel %vm379, 1, 0
        %v384 = vcvt.s32.f32 %v380
        %v385 = vcvt.s32.f32 %v381
        %v386 = vcvt.s32.f32 %v382
        %v387 = vcvt.s32.f32 %v383
        %v388 = vadd.f32 %v384, %v385
        %389 = vadd.xlane.f32.xlu0 %v388
        %v390 = vpop.xlane.xlu0 %389
        %v391 = vadd.f32 %v386, %v387
        %392 = vadd.xlane.f32.xlu0 %v391
        %v393 = vpop.xlane.xlu0 %392
        %v394 = vld [vmem:[%s262] sm:$0xff]
        %v395 = vld [vmem:[%s262 + $0x8] sm:$0xff]
        %v396 = vadd.f32 %v394, %v390
        %v397 = vadd.f32 %v395, %v393
        %vm398 = vcmask 7168
        %399 = vst.msk [vmem:[%s262] sm:$0xff] %vm398, %v396
        %400 = vst.msk [vmem:[%s262 + $0x8] sm:$0xff] %vm398, %v397
        %p401 = scmp.lt.s32.totalorder %s24, 1
        %s402 = scalar_select %p401, %s24, 1
        %p403 = scmp.lt.s32.totalorder %s25, 0
        %s404 = scalar_select %p403, %s25, 0
        %s405 = smul.addr %s404, 2
        %s406 = smul.addr %s402, 2
        %s407 = sadd.s32 %s405, %s406
        %s408 = smul.addr %s407, 8
        %s409 = scalar_lea.vmem %s2, %s408
        // Predicated region
        $region41: #{tpu_custom_call.1} parent=27 // pred_check
          %p410 = pneg %p126
        $region42: #{tpu_custom_call.1} parent=27 // pred_check_branch
          %412 = sbr.rel (%p410) target = $region44
        $region43: #{tpu_custom_call.1} parent=27 // pred_region
          _
        $region44: #{tpu_custom_call.1} parent=27 // pred_fallthru
          _
      $region28: #{tpu_custom_call.1} parent=5 // pred_fallthru
        _
      %p413 = scmp.le.s32.totalorder 2, %s14
      // Predicated region
      $region45: #{tpu_custom_call.1} parent=5 // pred_check
        %p414 = pneg %p413
      $region46: #{tpu_custom_call.1} parent=5 // pred_check_branch
        %416 = sbr.rel (%p414) target = $region48
      $region47: #{tpu_custom_call.1} parent=5 // pred_region
        %s417 = ssub.s32 %s14, 2
        // Predicated region
        $region49: #{tpu_custom_call.1} parent=47 // pred_check
          %p418 = pneg %p132
        $region50: #{tpu_custom_call.1} parent=47 // pred_check_branch
          %420 = sbr.rel (%p418) target = $region52
        $region51: #{tpu_custom_call.1} parent=47 // pred_region
          %p421 = scmp.lt.s32.totalorder %s27, 1
          %s422 = scalar_select %p421, %s27, 1
          %p423 = scmp.lt.s32.totalorder %s28, 0
          %s424 = scalar_select %p423, %s28, 0
          %s425 = smul.addr %s424, 2
          %s426 = smul.addr %s422, 2
          %s427 = sadd.s32 %s425, %s426
          %s428 = smul.addr %s427, 8
          %s429 = scalar_lea.vmem %s2, %s428
        $region52: #{tpu_custom_call.1} parent=47 // pred_fallthru
          _
      $region48: #{tpu_custom_call.1} parent=5 // pred_fallthru
        _
    $region6: #{tpu_custom_call.1} parent=1 // loop_footer
      %s18 = sadd.s32 1, %s14
    $region7: #{tpu_custom_call.1} parent=1 // loop_footer_branch
      %13 = sbr.rel target = $region3
    $region8: #{tpu_custom_call.1} parent=1 // loop_exit
      _
    %430 = vsyncpa [#allocation3], 1
    %s431 = scalar_lea.sflag [#allocation3], 1
    %432 = vsyncpa %s431, 1
    %433 = vsyncpa [#allocation5], 1
    %s434 = scalar_lea.sflag [#allocation5], 1
    %435 = vsyncpa %s434, 1

</llo_original>
